<compile_context>
chip_gen: v7x
topology: tpu7x:2x2x1
jax: 0.10.0
libtpu: 0.0.40
codegen_flags: <defaults>
</compile_context>

<pallas_src>
import functools

import jax
import jax.numpy as jnp
from jax.experimental import pallas as pl
from jax.experimental.pallas import tpu as pltpu


def _round_up(v, m):
    return (v + m - 1) // m * m


# --------------------------------------------------------------------------- #
# Kernel
# --------------------------------------------------------------------------- #
def _temporal_self_attn_kernel(x_ref, wqkv_ref, bqkv_ref, wout_ref, bout_ref,
                               o_ref, *, bb, t, cp, mxu_dtype, approx_recip):
    rows = bb * t
    x = x_ref[...]                                        # (bb, T, Cp)
    # temporal mean-centering: x - x.mean(dim=1, keepdim=True)
    x = x - jnp.mean(x, axis=1, keepdims=True)

    # QKV projection as ONE matmul: (bb*T, Cp) @ (Cp, 3Cp); f32 accumulation.
    # The reshape is a free view because Cp is a multiple of 128.
    x2 = x.reshape(rows, cp)
    qkv = jnp.dot(x2, wqkv_ref[...], preferred_element_type=jnp.float32)
    qkv = (qkv + bqkv_ref[...]).reshape(bb, t, 3 * cp)    # bias in f32

    # 1/sqrt(C) already folded into the Q slice of W_qkv / b_qkv on the host.
    # Slices land on Cp (=128-multiple) boundaries -> no relayout.
    q = qkv[..., 0 * cp:1 * cp].astype(mxu_dtype)
    k = qkv[..., 1 * cp:2 * cp].astype(mxu_dtype)
    v = qkv[..., 2 * cp:3 * cp].astype(mxu_dtype)

    # Batched scaled-dot-product attention over frames: (bb, T, T) logits.
    # Operands are in mxu_dtype (bf16 on v6e/v7x) -> fast MXU path; f32 accum.
    s = jnp.einsum('btd,bsd->bts', q, k, preferred_element_type=jnp.float32)
    s = s - jnp.max(s, axis=-1, keepdims=True)
    p = jnp.exp(s)
    p = p * pl.reciprocal(jnp.sum(p, axis=-1, keepdims=True), approx=approx_recip)
    out = jnp.einsum('bts,bsd->btd', p.astype(mxu_dtype), v,
                     preferred_element_type=jnp.float32)

    # Spectrally-normalized output projection, again one big matmul.
    out2 = out.reshape(rows, cp).astype(mxu_dtype)
    y = jnp.dot(out2, wout_ref[...], preferred_element_type=jnp.float32)
    y = y + bout_ref[...]

    # single lane-dense (bb, T, Cp) slab store per grid step
    o_ref[...] = y.reshape(bb, t, cp).astype(o_ref.dtype)


# --------------------------------------------------------------------------- #
# Host-side helpers
# --------------------------------------------------------------------------- #
def _auto_compute_dtype():
    """bf16 on v6e/v7x (bf16 VPU + fast bf16 MXU), f32 otherwise (e.g. v5e)."""
    try:
        kind = jax.devices()[0].device_kind.lower()
    except Exception:
        return jnp.float32
    if any(tag in kind for tag in ("v6", "v7", "trillium")):
        return jnp.bfloat16
    return jnp.float32


def _per_elem_vmem_bytes(T, Cp, compute_itemsize):
    """Approximate live VMEM bytes contributed by one batch element per step."""
    return (T * Cp * (4 * compute_itemsize       # x tile + out tile, double-buffered
                      + 5 * 4                    # f32: qkv (3*Cp) + attn out + proj out
                      + 4 * compute_itemsize)    # mxu-dtype casts of q/k/v + attn out
            + 2 * T * T * 4)                     # logits + probs (f32)


def _choose_batch_block(B, T, Cp, compute_itemsize, weight_resident_bytes,
                        vmem_budget_bytes=24 << 20, target_rows=512):
    """VMEM-aware batch-block size.

    Picks the largest bb such that (a) live VMEM stays under the budget after
    subtracting resident weights, (b) bb*T is around target_rows (full MXU
    passes without huge blocks), and (c) there are >= 2 grid steps when B >= 2
    so both v7x TensorCores get work.  Never requires bb to divide B.
    """
    budget = max(vmem_budget_bytes - weight_resident_bytes, 2 << 20)
    per_elem = max(_per_elem_vmem_bytes(T, Cp, compute_itemsize), 1)
    max_bb = max(1, int(budget // per_elem))
    bb = max(1, min(B, max_bb, -(-target_rows // T)))      # ceil(target_rows/T)
    if B >= 2 and -(-B // bb) < 2:                          # guarantee grid >= 2
        bb = -(-B // 2)
    return max(1, min(bb, B, max_bb))


def temporal_self_attention(x, w_qkv, b_qkv, w_out_sn, b_out, *,
                            batch_block=None, compute_dtype="auto",
                            approx_softmax_recip=True):
    """TemporalSelfAttention forward.

    x: (B, T, C).  Weights stored as (in, out): w_qkv (C, 3C) with columns
    ordered [q | k | v], w_out_sn (C, C) already spectrally normalized.
    Biases: b_qkv (3C,), b_out (C,).  Pass UNSCALED weights: the 1/sqrt(C)
    attention scale is folded into the Q projection here.

    compute_dtype: "auto" -> bf16 on v6e/v7x, f32 on v5e / unknown.  All
    matmuls accumulate in f32 and softmax math stays in f32 regardless.
    approx_softmax_recip: EUP approximate reciprocal in the softmax (rows do
    not sum to exactly 1); set False if exact normalization matters.
    """
    B, T, C = x.shape
    orig_dtype = x.dtype

    if compute_dtype == "auto":
        compute_dtype = _auto_compute_dtype()
    if compute_dtype is None:
        compute_dtype = jnp.float32
    itemsize = jnp.dtype(compute_dtype).itemsize

    # --- lane-dense channel padding ------------------------------------------
    Cp = _round_up(max(C, 1), 128)
    scale = C ** (-0.5)

    w_qkv = jnp.asarray(w_qkv, jnp.float32)
    b_qkv = jnp.reshape(jnp.asarray(b_qkv, jnp.float32), (3 * C,))
    w_out = jnp.asarray(w_out_sn, jnp.float32)
    b_out = jnp.reshape(jnp.asarray(b_out, jnp.float32), (C,))

    # Fold the attention scale into the Q projection (weight AND bias) so the
    # kernel never multiplies the (T, T) logits.
    w_qkv = w_qkv.at[:, :C].multiply(scale)
    b_qkv = b_qkv.at[:C].multiply(scale)

    def pad_qkv_weight(w2d):      # (C, 3C) -> (Cp, 3Cp), chunks at Cp boundaries
        chunks = [w2d[:, i * C:(i + 1) * C] for i in range(3)]
        chunks = [jnp.pad(c, ((0, Cp - C), (0, Cp - C))) for c in chunks]
        return jnp.concatenate(chunks, axis=1)

    def pad_qkv_bias(b1d):        # (3C,) -> (1, 3Cp)
        chunks = [b1d[i * C:(i + 1) * C] for i in range(3)]
        chunks = [jnp.pad(c, (0, Cp - C)) for c in chunks]
        return jnp.concatenate(chunks)[None, :]

    w_qkv_p = pad_qkv_weight(w_qkv).astype(compute_dtype)            # (Cp, 3Cp)
    b_qkv_p = pad_qkv_bias(b_qkv)                                    # (1, 3Cp) f32
    w_out_p = jnp.pad(w_out, ((0, Cp - C), (0, Cp - C))).astype(compute_dtype)
    b_out_p = jnp.pad(b_out, (0, Cp - C))[None, :]                   # (1, Cp) f32

    x_p = jnp.pad(x, ((0, 0), (0, 0), (0, Cp - C))).astype(compute_dtype)

    # --- weights residency / batch-block / grid ------------------------------
    w_core_bytes = (Cp * 3 * Cp + Cp * Cp) * itemsize
    # Grid-invariant weights are fetched once (constant index_map) but would be
    # double-buffered by default; request a single buffer once they are large
    # enough to matter (frees VMEM for bigger batch blocks, esp. on v7x).
    single_buffer_weights = w_core_bytes > (4 << 20)
    weight_resident = (w_core_bytes * (1 if single_buffer_weights else 2)
                       + 2 * (4 * Cp) * 4)                           # + biases

    bb = batch_block if batch_block is not None else _choose_batch_block(
        B, T, Cp, itemsize, weight_resident)
    bb = max(1, min(int(bb), B))
    grid = pl.cdiv(B, bb)
    Bp = grid * bb
    if Bp != B:                                   # no "bb must divide B" restriction
        x_p = jnp.pad(x_p, ((0, Bp - B), (0, 0), (0, 0)))

    # --- explicit scoped-VMEM limit (default is only 16/32 MiB) --------------
    vmem_est = weight_resident + bb * _per_elem_vmem_bytes(T, Cp, itemsize)
    vmem_limit = int(min(max(2 * vmem_est + (2 << 20), 32 << 20), 64 << 20))

    w_mode = pl.Buffered(1) if single_buffer_weights else None

    kernel = functools.partial(_temporal_self_attn_kernel, bb=bb, t=T, cp=Cp,
                               mxu_dtype=compute_dtype,
                               approx_recip=approx_softmax_recip)

    flops = (2 * Bp * T * Cp * 3 * Cp            # QKV projection
             + 4 * Bp * T * T * Cp               # q@k^T and attn@v
             + 2 * Bp * T * Cp * Cp)             # output projection
    bytes_accessed = (2 * Bp * T * Cp * itemsize  # x in + out
                      + w_core_bytes + 2 * (4 * Cp) * 4)
    cost = pl.CostEstimate(flops=int(flops),
                           transcendentals=int(Bp * T * T + Bp * T),
                           bytes_accessed=int(bytes_accessed))

    out = pl.pallas_call(
        kernel,
        out_shape=jax.ShapeDtypeStruct((Bp, T, Cp), compute_dtype),
        grid_spec=pltpu.PrefetchScalarGridSpec(
            num_scalar_prefetch=0,
            grid=(grid,),
            in_specs=[
                pl.BlockSpec((bb, T, Cp), lambda b: (b, 0, 0)),      # x tile (lane-dense)
                pl.BlockSpec((Cp, 3 * Cp), lambda b: (0, 0),
                             pipeline_mode=w_mode),                  # W_qkv (grid-invariant)
                pl.BlockSpec((1, 3 * Cp), lambda b: (0, 0)),         # b_qkv (f32)
                pl.BlockSpec((Cp, Cp), lambda b: (0, 0),
                             pipeline_mode=w_mode),                  # W_out (spec-norm'd)
                pl.BlockSpec((1, Cp), lambda b: (0, 0)),             # b_out (f32)
            ],
            out_specs=pl.BlockSpec((bb, T, Cp), lambda b: (b, 0, 0)),
        ),
        compiler_params=pltpu.CompilerParams(
            dimension_semantics=("parallel",),
            vmem_limit_bytes=vmem_limit),
        cost_estimate=cost,
    )(x_p, w_qkv_p, b_qkv_p, w_out_p, b_out_p)

    return out[:B, :, :C].astype(orig_dtype)


def spectral_normalize(w, n_iters=30, eps=1e-12):
    """Divide weight (out, in) by its largest singular value, estimated with
    deterministic power iteration (mirrors nn.utils.spectral_norm semantics).
    Parameter setup only; not part of the kernel hot path."""
    out_f, in_f = w.shape
    u = jnp.ones((out_f,), w.dtype) / jnp.sqrt(out_f)
    v = None
    for _ in range(n_iters):
        v = w.T @ u
        v = v / (jnp.linalg.norm(v) + eps)
        u = w @ v
        u = u / (jnp.linalg.norm(u) + eps)
    sigma = u @ (w @ v)
    return w / sigma


def reference_forward(x, w_qkv, b_qkv, w_out_sn, b_out):
    """Pure-JAX reference mirroring the PyTorch forward."""
    C = x.shape[-1]
    xc = x - jnp.mean(x, axis=1, keepdims=True)
    qkv = xc @ w_qkv + b_qkv
    q, k, v = jnp.split(qkv, 3, axis=-1)
    attn = (q @ jnp.swapaxes(k, -2, -1)) * (C ** -0.5)
    attn = jax.nn.softmax(attn, axis=-1)
    out = attn @ v
    return out @ w_out_sn + b_out


if __name__ == "__main__":
    B, T, C = 2, 8, 32  # batch=2, frames=8, channels(dim)=32

    key = jax.random.PRNGKey(0)
    k_x, k_wqkv, k_bqkv, k_wout, k_bout = jax.random.split(key, 5)

    x = jax.random.normal(k_x, (B, T, C), dtype=jnp.float32)

    # qkv = nn.Linear(C, 3C): weight (3C, C), bias (3C,)
    w_qkv_pt = jax.random.normal(k_wqkv, (3 * C, C), dtype=jnp.float32) * 0.05
    b_qkv = jax.random.normal(k_bqkv, (3 * C,), dtype=jnp.float32) * 0.05

    # out_proj = spectral_norm(nn.Linear(C, C)): weight (C, C) / sigma, bias (C,)
    w_out_pt = jax.random.normal(k_wout, (C, C), dtype=jnp.float32) * 0.05
    b_out = jax.random.normal(k_bout, (C,), dtype=jnp.float32) * 0.05
    w_out_sn_pt = spectral_normalize(w_out_pt)

    # store as (in, out) so the kernel computes x @ W + b
    w_qkv = w_qkv_pt.T                  # (C, 3C)
    w_out_sn = w_out_sn_pt.T            # (C, C)

    ref = reference_forward(x, w_qkv, b_qkv, w_out_sn, b_out)

    # f32 path (tight tolerance; approx EUP reciprocal perturbs low-order bits
    # of the softmax, hence 2e-3 rather than 1e-5).
    out_f32 = temporal_self_attention(x, w_qkv, b_qkv, w_out_sn, b_out,
                                      compute_dtype=jnp.float32)
    out_f32 = jax.block_until_ready(out_f32)
    assert out_f32.shape == (B, T, C)
    assert jnp.allclose(out_f32, ref, atol=2e-3, rtol=2e-3), "f32 mismatch vs reference"

    # bf16 path (default on v6e/v7x): all four matmuls on the bf16 MXU path
    # with f32 accumulation; looser tolerance.
    out_bf16 = temporal_self_attention(x, w_qkv, b_qkv, w_out_sn, b_out,
                                       compute_dtype=jnp.bfloat16)
    out_bf16 = jax.block_until_ready(out_bf16)
    assert out_bf16.shape == (B, T, C)
    assert jnp.allclose(out_bf16, ref, atol=5e-2, rtol=5e-2), "bf16 mismatch vs reference"

    print("KERNEL_OK")
</pallas_src>

<mosaic_0001>
module attributes {stable_mosaic.version = 11 : i64} {
  func.func @_temporal_self_attn_kernel(%arg0: i32, %arg1: memref<1x8x128xf32, #tpu.memory_space<vmem>>, %arg2: memref<128x384xf32, #tpu.memory_space<vmem>>, %arg3: memref<1x384xf32, #tpu.memory_space<vmem>>, %arg4: memref<128x128xf32, #tpu.memory_space<vmem>>, %arg5: memref<1x128xf32, #tpu.memory_space<vmem>>, %arg6: memref<1x8x128xf32, #tpu.memory_space<vmem>>) attributes {dimension_semantics = [#tpu.dimension_semantics<parallel>], iteration_bounds = array<i64: 2>, scalar_prefetch = 0 : i64, scratch_operands = 0 : i64, tpu.core_type = #tpu.core_type<tc>, window_params = [{transform_indices = @transform_0, window_bounds = array<i64: 1, 8, 128>}, {pipeline_mode = #tpu.pipeline_mode<synchronous>, transform_indices = @transform_1, window_bounds = array<i64: 128, 384>}, {pipeline_mode = #tpu.pipeline_mode<synchronous>, transform_indices = @transform_2, window_bounds = array<i64: 1, 384>}, {pipeline_mode = #tpu.pipeline_mode<synchronous>, transform_indices = @transform_3, window_bounds = array<i64: 128, 128>}, {pipeline_mode = #tpu.pipeline_mode<synchronous>, transform_indices = @transform_4, window_bounds = array<i64: 1, 128>}, {transform_indices = @transform_5, window_bounds = array<i64: 1, 8, 128>}]} {
    %c0 = arith.constant 0 : index
    %c0_0 = arith.constant 0 : index
    %c0_1 = arith.constant 0 : index
    %0 = vector.load %arg1[%c0, %c0_0, %c0_1] : memref<1x8x128xf32, #tpu.memory_space<vmem>>, vector<1x8x128xf32>
    %cst = arith.constant dense<0.000000e+00> : vector<1x128xf32>
    %1 = vector.multi_reduction <add>, %0, %cst [1] : vector<1x8x128xf32> to vector<1x128xf32>
    %2 = vector.shape_cast %1 : vector<1x128xf32> to vector<1x1x128xf32>
    %cst_2 = arith.constant 8.000000e+00 : f32
    %3 = vector.broadcast %cst_2 : f32 to vector<1x1x128xf32>
    %4 = arith.divf %2, %3 : vector<1x1x128xf32>
    %5 = vector.broadcast %4 : vector<1x1x128xf32> to vector<1x8x128xf32>
    %6 = arith.subf %0, %5 : vector<1x8x128xf32>
    %7 = vector.shape_cast %6 : vector<1x8x128xf32> to vector<8x128xf32>
    %c0_3 = arith.constant 0 : index
    %c0_4 = arith.constant 0 : index
    %8 = vector.load %arg2[%c0_3, %c0_4] : memref<128x384xf32, #tpu.memory_space<vmem>>, vector<128x384xf32>
    %cst_5 = arith.constant dense<0.000000e+00> : vector<8x384xf32>
    %9 = tpu.matmul %7, %8, %cst_5 {dimension_numbers = #tpu.dot_dimension_numbers<[1], [0], [0], [1], [0, 0, 1, 1], [], []>} : vector<8x128xf32>, vector<128x384xf32>, vector<8x384xf32> -> vector<8x384xf32>
    %c0_6 = arith.constant 0 : index
    %c0_7 = arith.constant 0 : index
    %10 = vector.load %arg3[%c0_6, %c0_7] : memref<1x384xf32, #tpu.memory_space<vmem>>, vector<1x384xf32>
    %11 = vector.broadcast %10 : vector<1x384xf32> to vector<8x384xf32>
    %12 = arith.addf %9, %11 : vector<8x384xf32>
    %13 = vector.shape_cast %12 : vector<8x384xf32> to vector<1x8x384xf32>
    %14 = vector.extract_strided_slice %13 {offsets = [0, 0, 0], sizes = [1, 8, 128], strides = [1, 1, 1]} : vector<1x8x384xf32> to vector<1x8x128xf32>
    %15 = vector.extract_strided_slice %13 {offsets = [0, 0, 128], sizes = [1, 8, 128], strides = [1, 1, 1]} : vector<1x8x384xf32> to vector<1x8x128xf32>
    %16 = vector.extract_strided_slice %13 {offsets = [0, 0, 256], sizes = [1, 8, 128], strides = [1, 1, 1]} : vector<1x8x384xf32> to vector<1x8x128xf32>
    "tpu.trace_start"() <{level = 10 : i32, message = "btd,bsd->bts"}> : () -> ()
    %cst_8 = arith.constant dense<0.000000e+00> : vector<1x8x8xf32>
    %17 = tpu.matmul %14, %15, %cst_8 {dimension_numbers = #tpu.dot_dimension_numbers<[2], [2], [1], [1], [0, 0, 0, 1, 1, 1], [0], [0]>} : vector<1x8x128xf32>, vector<1x8x128xf32>, vector<1x8x8xf32> -> vector<1x8x8xf32>
    "tpu.trace_stop"() : () -> ()
    %cst_9 = arith.constant dense<0xFF800000> : vector<1x8xf32>
    %18 = vector.multi_reduction <maximumf>, %17, %cst_9 [2] : vector<1x8x8xf32> to vector<1x8xf32>
    %19 = vector.shape_cast %18 : vector<1x8xf32> to vector<1x8x1xf32>
    %20 = vector.broadcast %19 : vector<1x8x1xf32> to vector<1x8x8xf32>
    %21 = arith.subf %17, %20 : vector<1x8x8xf32>
    %22 = math.exp %21 : vector<1x8x8xf32>
    %cst_10 = arith.constant dense<0.000000e+00> : vector<1x8xf32>
    %23 = vector.multi_reduction <add>, %22, %cst_10 [2] : vector<1x8x8xf32> to vector<1x8xf32>
    %24 = vector.shape_cast %23 : vector<1x8xf32> to vector<1x8x1xf32>
    %25 = tpu.reciprocal %24 {approx = true} : vector<1x8x1xf32> -> vector<1x8x1xf32>
    %26 = vector.broadcast %25 : vector<1x8x1xf32> to vector<1x8x8xf32>
    %27 = arith.mulf %22, %26 : vector<1x8x8xf32>
    "tpu.trace_start"() <{level = 10 : i32, message = "bts,bsd->btd"}> : () -> ()
    %cst_11 = arith.constant dense<0.000000e+00> : vector<1x8x128xf32>
    %28 = tpu.matmul %27, %16, %cst_11 {dimension_numbers = #tpu.dot_dimension_numbers<[2], [1], [1], [2], [0, 0, 0, 1, 1, 2], [0], [0]>} : vector<1x8x8xf32>, vector<1x8x128xf32>, vector<1x8x128xf32> -> vector<1x8x128xf32>
    "tpu.trace_stop"() : () -> ()
    %29 = vector.shape_cast %28 : vector<1x8x128xf32> to vector<8x128xf32>
    %c0_12 = arith.constant 0 : index
    %c0_13 = arith.constant 0 : index
    %30 = vector.load %arg4[%c0_12, %c0_13] : memref<128x128xf32, #tpu.memory_space<vmem>>, vector<128x128xf32>
    %cst_14 = arith.constant dense<0.000000e+00> : vector<8x128xf32>
    %31 = tpu.matmul %29, %30, %cst_14 {dimension_numbers = #tpu.dot_dimension_numbers<[1], [0], [0], [1], [0, 0, 1, 1], [], []>} : vector<8x128xf32>, vector<128x128xf32>, vector<8x128xf32> -> vector<8x128xf32>
    %c0_15 = arith.constant 0 : index
    %c0_16 = arith.constant 0 : index
    %32 = vector.load %arg5[%c0_15, %c0_16] : memref<1x128xf32, #tpu.memory_space<vmem>>, vector<1x128xf32>
    %33 = vector.broadcast %32 : vector<1x128xf32> to vector<8x128xf32>
    %34 = arith.addf %31, %33 : vector<8x128xf32>
    %35 = vector.shape_cast %34 : vector<8x128xf32> to vector<1x8x128xf32>
    %c0_17 = arith.constant 0 : index
    %c0_18 = arith.constant 0 : index
    %c0_19 = arith.constant 0 : index
    %36 = vector.load %arg6[%c0_17, %c0_18, %c0_19] : memref<1x8x128xf32, #tpu.memory_space<vmem>>, vector<1x8x128xf32>
    tpu.vector_store %arg6[%c0_17, %c0_18, %c0_19], %35 {strides = array<i32>} : memref<1x8x128xf32, #tpu.memory_space<vmem>>, vector<1x8x128xf32>,
    return
  }
  func.func @transform_0(%arg0: i32) -> (i32, i32, i32) {
    %c0_i32 = arith.constant 0 : i32
    %c0_i32_0 = arith.constant 0 : i32
    %c0_i32_1 = arith.constant 0 : i32
    return %arg0, %c0_i32, %c0_i32_0 : i32, i32, i32
  }
  func.func @transform_1(%arg0: i32) -> (i32, i32) {
    %c0_i32 = arith.constant 0 : i32
    %c0_i32_0 = arith.constant 0 : i32
    %c0_i32_1 = arith.constant 0 : i32
    return %c0_i32, %c0_i32_0 : i32, i32
  }
  func.func @transform_2(%arg0: i32) -> (i32, i32) {
    %c0_i32 = arith.constant 0 : i32
    %c0_i32_0 = arith.constant 0 : i32
    %c0_i32_1 = arith.constant 0 : i32
    return %c0_i32, %c0_i32_0 : i32, i32
  }
  func.func @transform_3(%arg0: i32) -> (i32, i32) {
    %c0_i32 = arith.constant 0 : i32
    %c0_i32_0 = arith.constant 0 : i32
    %c0_i32_1 = arith.constant 0 : i32
    return %c0_i32, %c0_i32_0 : i32, i32
  }
  func.func @transform_4(%arg0: i32) -> (i32, i32) {
    %c0_i32 = arith.constant 0 : i32
    %c0_i32_0 = arith.constant 0 : i32
    %c0_i32_1 = arith.constant 0 : i32
    return %c0_i32, %c0_i32_0 : i32, i32
  }
  func.func @transform_5(%arg0: i32) -> (i32, i32, i32) {
    %c0_i32 = arith.constant 0 : i32
    %c0_i32_0 = arith.constant 0 : i32
    %c0_i32_1 = arith.constant 0 : i32
    return %arg0, %c0_i32, %c0_i32_0 : i32, i32, i32
  }
}

</mosaic_0001>

<llo_original>
// kernel: tpu_custom_call.1
$region0: #{tpu_custom_call.1}
  #allocation0 [shape = 'u32[]', space=smem, size = 0x4, offset = 0x4, fixed_abs, tag = 'smem constant byte address 0x4 - core index']
  #allocation1 [shape = 'u32[144,128]{1,0:T(1,128)}', space=vmem, size = 0x12000, scoped, tag = 'internal scratch']
  %s0 = inlined_call_operand.hbm [shape: f32[2,8,128], index: 0, kind: input, shape index: {}]
  %s1 = inlined_call_operand.hbm [shape: f32[128,384], index: 1, kind: input, shape index: {}]
  %s2 = inlined_call_operand.vmem [shape: f32[1,384], index: 2, kind: input, shape index: {}]
  %s3 = inlined_call_operand.hbm [shape: f32[128,128], index: 3, kind: input, shape index: {}]
  %s4 = inlined_call_operand.vmem [shape: f32[1,128], index: 4, kind: input, shape index: {}]
  %s5 = inlined_call_operand.hbm [shape: f32[2,8,128], index: 5, kind: output, shape index: {}]
  %s6 = sld [smem:[#allocation0]]
  $region65: #{tpu_custom_call.1} parent=0
    _
  %s8 = ssub.s32 1, %s6
  %s9 = scalar_select 0, %s8, %s6
  $region1: #{tpu_custom_call.1} parent=0
    #allocation2 [shape = 'u8[8192]{0}', space=vmem, size = 0x2000, scoped, tag = 'input window, operand 0']
    #allocation3 [shape = 's32[2]{0}', space=sflag, size = 0x8, scoped, tag = 'scoped memory for tpu_custom_call.1']
    #allocation4 [shape = 's32[2]{0}', space=sflag, size = 0x8, scoped, tag = 'scoped memory for tpu_custom_call.1']
    #allocation5 [shape = 'u8[196608]{0}', space=vmem, size = 0x30000, scoped, tag = 'input window, operand 1, single buffered']
    #allocation6 [shape = 's32[1]{0}', space=sflag, size = 0x4, scoped, tag = 'scoped memory for tpu_custom_call.1']
    #allocation7 [shape = 'u8[65536]{0}', space=vmem, size = 0x10000, scoped, tag = 'input window, operand 3, single buffered']
    #allocation8 [shape = 'u8[8192]{0}', space=vmem, size = 0x2000, scoped, tag = 'output window, operand 0']
    %10 = vsyncpa [#allocation3], 0
    %s11 = scalar_lea.sflag [#allocation3], 1
    %12 = vsyncpa %s11, 0
    %13 = vsyncpa [#allocation6], 0
    %14 = vsyncpa [#allocation4], 0
    %s15 = scalar_lea.sflag [#allocation4], 1
    %16 = vsyncpa %s15, 0
    loop: start=0, step=1, limit=4
    $region2: #{tpu_custom_call.1} parent=1 // loop_pre_header
      _
    $region3: #{tpu_custom_call.1} parent=1 // loop_header
      %s18 = sphi 0, %s22
      %p19 = scmp.ge.s32.totalorder %s18, 4
      %s28 = sphi 0, %s30
      %s31 = sphi 0, %s28
      %s32 = sphi 0, %s31
      %s48 = sphi 0, %s32
      %s52 = sphi 0, %s52
      %s54 = sphi 0, %s52
      %s55 = sphi 0, %s54
      %s69 = sphi 0, %s55
      %s73 = sphi 0, %s73
      %s75 = sphi 0, %s73
      %s76 = sphi 0, %s75
      %s90 = sphi 0, %s76
      %s94 = sphi 0, %s94
      %s96 = sphi 0, %s94
      %s97 = sphi 0, %s96
      %s111 = sphi 0, %s97
      %s115 = sphi 0, %s115
      %s117 = sphi 0, %s115
      %s118 = sphi 0, %s117
      %s132 = sphi 0, %s118
      %s138 = sphi 0, %s140
      %s141 = sphi 0, %s138
      %s142 = sphi 0, %s141
      %s158 = sphi 0, %s142
    $region4: #{tpu_custom_call.1} parent=1 // loop_header_branch
      %21 = sbr.rel (%p19) target = $region8
    $region5: #{tpu_custom_call.1} parent=1 // loop_body
      %s23 = ssub.s32 %s18, 1
      %s24 = ssub.s32 %s18, 2
      %s25 = sadd.s32 %s18, 1
      %s26 = ssub.s32 %s18, %s25
      %p27 = scmp.eq.s32.totalorder %s26, 0
      %s29 = sadd.s32 %s28, 1
      %s30 = scalar_select %p27, %s28, %s29
      %p33 = pneg %p27
      %p34 = scmp.eq.s32.totalorder %s18, 1
      %p35 = por %p33, %p34
      %p36 = scmp.ne.s32.totalorder %s28, %s31
      %p37 = scmp.eq.s32.totalorder %s18, 0
      %p38 = por %p36, %p37
      %p39 = scmp.ne.s32.totalorder %s28, %s31
      %p40 = scmp.eq.s32.totalorder %s23, 1
      %p41 = por %p39, %p40
      %p42 = scmp.ne.s32.totalorder %s31, %s32
      %p43 = scmp.eq.s32.totalorder %s23, 0
      %p44 = por %p42, %p43
      %p45 = scmp.ne.s32.totalorder %s31, %s32
      %p46 = scmp.eq.s32.totalorder %s24, 1
      %p47 = por %p45, %p46
      %p49 = scmp.ne.s32.totalorder %s32, %s48
      %p50 = scmp.eq.s32.totalorder %s24, 0
      %p51 = por %p49, %p50
      %s53 = sadd.s32 %s52, 1
      %p56 = scmp.eq.s32.totalorder %s18, 1
      %p57 = scmp.ne.s32.totalorder %s52, %s54
      %p58 = scmp.eq.s32.totalorder %s18, 0
      %p59 = por %p57, %p58
      %p60 = scmp.ne.s32.totalorder %s52, %s54
      %p61 = scmp.eq.s32.totalorder %s23, 1
      %p62 = por %p60, %p61
      %p63 = scmp.ne.s32.totalorder %s54, %s55
      %p64 = scmp.eq.s32.totalorder %s23, 0
      %p65 = por %p63, %p64
      %p66 = scmp.ne.s32.totalorder %s54, %s55
      %p67 = scmp.eq.s32.totalorder %s24, 1
      %p68 = por %p66, %p67
      %p70 = scmp.ne.s32.totalorder %s55, %s69
      %p71 = scmp.eq.s32.totalorder %s24, 0
      %p72 = por %p70, %p71
      %s74 = sadd.s32 %s73, 1
      %p77 = scmp.eq.s32.totalorder %s18, 1
      %p78 = scmp.ne.s32.totalorder %s73, %s75
      %p79 = scmp.eq.s32.totalorder %s18, 0
      %p80 = por %p78, %p79
      %p81 = scmp.ne.s32.totalorder %s73, %s75
      %p82 = scmp.eq.s32.totalorder %s23, 1
      %p83 = por %p81, %p82
      %p84 = scmp.ne.s32.totalorder %s75, %s76
      %p85 = scmp.eq.s32.totalorder %s23, 0
      %p86 = por %p84, %p85
      %p87 = scmp.ne.s32.totalorder %s75, %s76
      %p88 = scmp.eq.s32.totalorder %s24, 1
      %p89 = por %p87, %p88
      %p91 = scmp.ne.s32.totalorder %s76, %s90
      %p92 = scmp.eq.s32.totalorder %s24, 0
      %p93 = por %p91, %p92
      %s95 = sadd.s32 %s94, 1
      %p98 = scmp.eq.s32.totalorder %s18, 1
      %p99 = scmp.ne.s32.totalorder %s94, %s96
      %p100 = scmp.eq.s32.totalorder %s18, 0
      %p101 = por %p99, %p100
      %p102 = scmp.ne.s32.totalorder %s94, %s96
      %p103 = scmp.eq.s32.totalorder %s23, 1
      %p104 = por %p102, %p103
      %p105 = scmp.ne.s32.totalorder %s96, %s97
      %p106 = scmp.eq.s32.totalorder %s23, 0
      %p107 = por %p105, %p106
      %p108 = scmp.ne.s32.totalorder %s96, %s97
      %p109 = scmp.eq.s32.totalorder %s24, 1
      %p110 = por %p108, %p109
      %p112 = scmp.ne.s32.totalorder %s97, %s111
      %p113 = scmp.eq.s32.totalorder %s24, 0
      %p114 = por %p112, %p113
      %s116 = sadd.s32 %s115, 1
      %p119 = scmp.eq.s32.totalorder %s18, 1
      %p120 = scmp.ne.s32.totalorder %s115, %s117
      %p121 = scmp.eq.s32.totalorder %s18, 0
      %p122 = por %p120, %p121
      %p123 = scmp.ne.s32.totalorder %s115, %s117
      %p124 = scmp.eq.s32.totalorder %s23, 1
      %p125 = por %p123, %p124
      %p126 = scmp.ne.s32.totalorder %s117, %s118
      %p127 = scmp.eq.s32.totalorder %s23, 0
      %p128 = por %p126, %p127
      %p129 = scmp.ne.s32.totalorder %s117, %s118
      %p130 = scmp.eq.s32.totalorder %s24, 1
      %p131 = por %p129, %p130
      %p133 = scmp.ne.s32.totalorder %s118, %s132
      %p134 = scmp.eq.s32.totalorder %s24, 0
      %p135 = por %p133, %p134
      %s136 = ssub.s32 %s18, %s25
      %p137 = scmp.eq.s32.totalorder %s136, 0
      %s139 = sadd.s32 %s138, 1
      %s140 = scalar_select %p137, %s138, %s139
      %p143 = pneg %p137
      %p144 = scmp.eq.s32.totalorder %s18, 1
      %p145 = por %p143, %p144
      %p146 = scmp.ne.s32.totalorder %s138, %s141
      %p147 = scmp.eq.s32.totalorder %s18, 0
      %p148 = por %p146, %p147
      %p149 = scmp.ne.s32.totalorder %s138, %s141
      %p150 = scmp.eq.s32.totalorder %s23, 1
      %p151 = por %p149, %p150
      %p152 = scmp.ne.s32.totalorder %s141, %s142
      %p153 = scmp.eq.s32.totalorder %s23, 0
      %p154 = por %p152, %p153
      %p155 = scmp.ne.s32.totalorder %s141, %s142
      %p156 = scmp.eq.s32.totalorder %s24, 1
      %p157 = por %p155, %p156
      %p159 = scmp.ne.s32.totalorder %s142, %s158
      %p160 = scmp.eq.s32.totalorder %s24, 0
      %p161 = por %p159, %p160
      %p162 = scmp.le.s32.totalorder 1, %s18
      %p163 = scmp.lt.s32.totalorder %s18, 3
      %p164 = pnand %p162, %p163
      %p165 = pneg %p164
      // Predicated region
      $region9: #{tpu_custom_call.1} parent=5 // pred_check
        _
      $region10: #{tpu_custom_call.1} parent=5 // pred_check_branch
        %167 = sbr.rel (%p164) target = $region12
      $region11: #{tpu_custom_call.1} parent=5 // pred_region
        %s168 = ssub.s32 %s18, 1
        // Predicated region
        $region13: #{tpu_custom_call.1} parent=11 // pred_check
          %p169 = pneg %p65
        $region14: #{tpu_custom_call.1} parent=11 // pred_check_branch
          %171 = sbr.rel (%p169) target = $region16
        $region15: #{tpu_custom_call.1} parent=11 // pred_region
          %s173 = ssub.s32 6144, 6144
          %174 = vsyncadd [#allocation6], %s173
          %s175 = sshll.u32 [#allocation5], 4
          %s176 = int_to_ptr.vmem [resolvable:$true] %s175
          %181 = dma.hbm_to_vmem [thread:$0]  %s1, 6144, %s176, [#allocation6], 384, 384, 24
        $region16: #{tpu_custom_call.1} parent=11 // pred_fallthru
          _
        // Predicated region
        $region17: #{tpu_custom_call.1} parent=11 // pred_check
          %p182 = pneg %p86
        $region18: #{tpu_custom_call.1} parent=11 // pred_check_branch
          %184 = sbr.rel (%p182) target = $region20
        $region19: #{tpu_custom_call.1} parent=11 // pred_region
          _
        $region20: #{tpu_custom_call.1} parent=11 // pred_fallthru
          _
        // Predicated region
        $region21: #{tpu_custom_call.1} parent=11 // pred_check
          %p185 = pneg %p107
        $region22: #{tpu_custom_call.1} parent=11 // pred_check_branch
          %187 = sbr.rel (%p185) target = $region24
        $region23: #{tpu_custom_call.1} parent=11 // pred_region
          %s189 = ssub.s32 2048, 2048
          %190 = vsyncadd [#allocation6], %s189
          %s191 = sshll.u32 [#allocation7], 4
          %s192 = int_to_ptr.vmem [resolvable:$true] %s191
          %197 = dma.hbm_to_vmem [thread:$0]  %s3, 2048, %s192, [#allocation6], 128, 128, 8
        $region24: #{tpu_custom_call.1} parent=11 // pred_fallthru
          _
        // Predicated region
        $region25: #{tpu_custom_call.1} parent=11 // pred_check
          %p198 = pneg %p128
        $region26: #{tpu_custom_call.1} parent=11 // pred_check_branch
          %200 = sbr.rel (%p198) target = $region28
        $region27: #{tpu_custom_call.1} parent=11 // pred_region
          _
        $region28: #{tpu_custom_call.1} parent=11 // pred_fallthru
          _
      $region12: #{tpu_custom_call.1} parent=5 // pred_fallthru
        _
      %p201 = scmp.lt.s32.totalorder %s18, 2
      // Predicated region
      $region29: #{tpu_custom_call.1} parent=5 // pred_check
        %p202 = pneg %p201
      $region30: #{tpu_custom_call.1} parent=5 // pred_check_branch
        %204 = sbr.rel (%p202) target = $region32
      $region31: #{tpu_custom_call.1} parent=5 // pred_region
        // Predicated region
        $region33: #{tpu_custom_call.1} parent=31 // pred_check
          %p205 = pneg %p38
        $region34: #{tpu_custom_call.1} parent=31 // pred_check_branch
          %207 = sbr.rel (%p205) target = $region36
        $region35: #{tpu_custom_call.1} parent=31 // pred_region
          %s208 = sand.u32 %s28, 1
          %s209 = scalar_lea.sflag [#allocation3], %s208
          %s210 = sand.u32 %s28, 1
          %s211 = smul.addr %s210, 8
          %s212 = scalar_lea.vmem [#allocation2], %s211
          %s214 = ssub.s32 128, 128
          %215 = vsyncadd %s209, %s214
          %s216 = smul.addr %s18, 128
          %s217 = scalar_lea.hbm %s0, %s216
          %s219 = sshll.u32 %s212, 4
          %s220 = int_to_ptr.vmem [resolvable:$true] %s219
          %222 = dma.hbm_to_vmem [thread:$0]  %s217, 128, %s220, %s209
        $region36: #{tpu_custom_call.1} parent=31 // pred_fallthru
          _
      $region32: #{tpu_custom_call.1} parent=5 // pred_fallthru
        _
      %p223 = scmp.le.s32.totalorder 1, %s18
      %p224 = scmp.lt.s32.totalorder %s18, 3
      %p225 = pnand %p223, %p224
      %p226 = pneg %p225
      // Predicated region
      $region37: #{tpu_custom_call.1} parent=5 // pred_check
        _
      $region38: #{tpu_custom_call.1} parent=5 // pred_check_branch
        %228 = sbr.rel (%p225) target = $region40
      $region39: #{tpu_custom_call.1} parent=5 // pred_region
        %s229 = ssub.s32 %s18, 1
        %s230 = sand.u32 %s31, 1
        %s231 = scalar_lea.sflag [#allocation3], %s230
        %s232 = sand.u32 %s31, 1
        %s233 = smul.addr %s232, 8
        %s234 = scalar_lea.vmem [#allocation2], %s233
        // Predicated region
        $region41: #{tpu_custom_call.1} parent=39 // pred_check
          %p235 = pneg %p44
        $region42: #{tpu_custom_call.1} parent=39 // pred_check_branch
          %237 = sbr.rel (%p235) target = $region44
        $region43: #{tpu_custom_call.1} parent=39 // pred_region
          %238 = dma.done %s231, 128
        $region44: #{tpu_custom_call.1} parent=39 // pred_fallthru
          _
        // Predicated region
        $region45: #{tpu_custom_call.1} parent=39 // pred_check
          %p239 = pneg %p65
        $region46: #{tpu_custom_call.1} parent=39 // pred_check_branch
          %241 = sbr.rel (%p239) target = $region48
        $region47: #{tpu_custom_call.1} parent=39 // pred_region
          %242 = dma.done [#allocation6], 6144
        $region48: #{tpu_custom_call.1} parent=39 // pred_fallthru
          _
        // Predicated region
        $region49: #{tpu_custom_call.1} parent=39 // pred_check
          %p243 = pneg %p107
        $region50: #{tpu_custom_call.1} parent=39 // pred_check_branch
          %245 = sbr.rel (%p243) target = $region52
        $region51: #{tpu_custom_call.1} parent=39 // pred_region
          %246 = dma.done [#allocation6], 2048
        $region52: #{tpu_custom_call.1} parent=39 // pred_fallthru
          _
        %s247 = sand.u32 %s31, 1
        %s248 = scalar_lea.sflag [#allocation3], %s247
        %s249 = sand.u32 %s31, 1
        %s250 = smul.addr %s249, 8
        %s251 = scalar_lea.vmem [#allocation2], %s250
        %p252 = pneg %p44
        %p253 = pneg %p41
        %p254 = pneg %p65
        %p255 = pneg %p62
        %p256 = pneg %p86
        %p257 = pneg %p83
        %p258 = pneg %p107
        %p259 = pneg %p104
        %p260 = pneg %p128
        %p261 = pneg %p125
        %p262 = pneg %p154
        %p263 = pneg %p151
        %s264 = sand.u32 %s141, 1
        %s265 = scalar_lea.sflag [#allocation4], %s264
        %s266 = sand.u32 %s141, 1
        %s267 = smul.addr %s266, 8
        %s268 = scalar_lea.vmem [#allocation8], %s267
        %v269 = vld [vmem:[%s234] sm:$0xff]
        %v270 = vrot.slane %v269, 4
        %v271 = vadd.f32 %v269, %v270
        %v272 = vrot.slane %v271, 2
        %v273 = vadd.f32 %v271, %v272
        %v274 = vrot.slane %v273, 1
        %v275 = vadd.f32 %v273, %v274
        %v276 = vrcp.pop 8.0
        %v277 = vmul.f32 %v275, %v276
        %v278 = vsub.f32 %v269, %v277
        %v279 = vld [vmem:[#allocation5] sm:$0xff]
        %v280 = vld [vmem:[#allocation5 + $0x8] sm:$0xff]
        %v281 = vld [vmem:[#allocation5 + $0x10] sm:$0xff]
        %v282 = vld [vmem:[#allocation5 + $0x18] sm:$0xff]
        %v283 = vld [vmem:[#allocation5 + $0x20] sm:$0xff]
        %v284 = vld [vmem:[#allocation5 + $0x28] sm:$0xff]
        %v285 = vld [vmem:[#allocation5 + $0x30] sm:$0xff]
        %v286 = vld [vmem:[#allocation5 + $0x38] sm:$0xff]
        %v287 = vld [vmem:[#allocation5 + $0x40] sm:$0xff]
        %v288 = vld [vmem:[#allocation5 + $0x48] sm:$0xff]
        %v289 = vld [vmem:[#allocation5 + $0x50] sm:$0xff]
        %v290 = vld [vmem:[#allocation5 + $0x58] sm:$0xff]
        %v291 = vld [vmem:[#allocation5 + $0x60] sm:$0xff]
        %v292 = vld [vmem:[#allocation5 + $0x68] sm:$0xff]
        %v293 = vld [vmem:[#allocation5 + $0x70] sm:$0xff]
        %v294 = vld [vmem:[#allocation5 + $0x78] sm:$0xff]
        %v295 = vld [vmem:[#allocation5 + $0x80] sm:$0xff]
        %v296 = vld [vmem:[#allocation5 + $0x88] sm:$0xff]
        %v297 = vld [vmem:[#allocation5 + $0x90] sm:$0xff]
        %v298 = vld [vmem:[#allocation5 + $0x98] sm:$0xff]
        %v299 = vld [vmem:[#allocation5 + $0xa0] sm:$0xff]
        %v300 = vld [vmem:[#allocation5 + $0xa8] sm:$0xff]
        %v301 = vld [vmem:[#allocation5 + $0xb0] sm:$0xff]
        %v302 = vld [vmem:[#allocation5 + $0xb8] sm:$0xff]
        %v303 = vld [vmem:[#allocation5 + $0xc0] sm:$0xff]
        %v304 = vld [vmem:[#allocation5 + $0xc8] sm:$0xff]
        %v305 = vld [vmem:[#allocation5 + $0xd0] sm:$0xff]
        %v306 = vld [vmem:[#allocation5 + $0xd8] sm:$0xff]
        %v307 = vld [vmem:[#allocation5 + $0xe0] sm:$0xff]
        %v308 = vld [vmem:[#allocation5 + $0xe8] sm:$0xff]
        %v309 = vld [vmem:[#allocation5 + $0xf0] sm:$0xff]
        %v310 = vld [vmem:[#allocation5 + $0xf8] sm:$0xff]
        %v311 = vld [vmem:[#allocation5 + $0x100] sm:$0xff]
        %v312 = vld [vmem:[#allocation5 + $0x108] sm:$0xff]
        %v313 = vld [vmem:[#allocation5 + $0x110] sm:$0xff]
        %v314 = vld [vmem:[#allocation5 + $0x118] sm:$0xff]
        %v315 = vld [vmem:[#allocation5 + $0x120] sm:$0xff]
        %v316 = vld [vmem:[#allocation5 + $0x128] sm:$0xff]
        %v317 = vld [vmem:[#allocation5 + $0x130] sm:$0xff]
        %v318 = vld [vmem:[#allocation5 + $0x138] sm:$0xff]
        %v319 = vld [vmem:[#allocation5 + $0x140] sm:$0xff]
        %v320 = vld [vmem:[#allocation5 + $0x148] sm:$0xff]
        %v321 = vld [vmem:[#allocation5 + $0x150] sm:$0xff]
        %v322 = vld [vmem:[#allocation5 + $0x158] sm:$0xff]
        %v323 = vld [vmem:[#allocation5 + $0x160] sm:$0xff]
        %v324 = vld [vmem:[#allocation5 + $0x168] sm:$0xff]
        %v325 = vld [vmem:[#allocation5 + $0x170] sm:$0xff]
        %v326 = vld [vmem:[#allocation5 + $0x178] sm:$0xff]
        %v327 = vld [vmem:[%s2] sm:$0x7]
        %v329 = vlaneseq
        %v330 = vshrl.u32 %v329, 7
        %v331 = vsub.s32 0, %v330
        %v332 = vrot.slane %v327, %v331
        %v333 = vlaneseq
        %v334 = vshrl.u32 %v333, 7
        %v335 = vsub.s32 1, %v334
        %v336 = vrot.slane %v327, %v335
        %v337 = vlaneseq
        %v338 = vshrl.u32 %v337, 7
        %v339 = vsub.s32 2, %v338
        %v340 = vrot.slane %v327, %v339
        %344 = vmatprep.subr.mxu0 %v280
        %345 = vmatpush1.msra.mxu0 %v279
        %346 = vmatprep.subr.mxu0 %v283
        %347 = vmatpush1.msra.mxu0 %v282
        %348 = vmatprep.subr.mxu0 %v286
        %349 = vmatpush1.msra.mxu0 %v285
        %350 = vmatprep.subr.mxu0 %v289
        %351 = vmatpush1.msra.mxu0 %v288
        %352 = vmatprep.subr.mxu0 %v292
        %353 = vmatpush1.msra.mxu0 %v291
        %354 = vmatprep.subr.mxu0 %v295
        %355 = vmatpush1.msra.mxu0 %v294
        %356 = vmatprep.subr.mxu0 %v298
        %357 = vmatpush1.msra.mxu0 %v297
        %358 = vmatprep.subr.mxu0 %v301
        %359 = vmatpush1.msra.mxu0 %v300
        %360 = vmatprep.subr.mxu0 %v304
        %361 = vmatpush1.msra.mxu0 %v303
        %362 = vmatprep.subr.mxu0 %v307
        %363 = vmatpush1.msra.mxu0 %v306
        %364 = vmatprep.subr.mxu0 %v310
        %365 = vmatpush1.msra.mxu0 %v309
        %366 = vmatprep.subr.mxu0 %v313
        %367 = vmatpush1.msra.mxu0 %v312
        %368 = vmatprep.subr.mxu0 %v316
        %369 = vmatpush1.msra.mxu0 %v315
        %370 = vmatprep.subr.mxu0 %v319
        %371 = vmatpush1.msra.mxu0 %v318
        %372 = vmatprep.subr.mxu0 %v322
        %373 = vmatpush1.msra.mxu0 %v321
        %374 = vmatprep.subr.mxu0 %v325
        %375 = vmatpush1.msra.mxu0 %v324
        %376 = vmatprep.subr.mxu0 0.0
        %377 = vmatpush1.msra.mxu0 0.0
        %378 = vmatprep.subr.mxu0 0.0
        %379 = vmatpush1.msra.mxu0 0.0
        %380 = vmatprep.subr.mxu0 0.0
        %381 = vmatpush1.msra.mxu0 0.0
        %382 = vmatprep.subr.mxu0 0.0
        %383 = vmatpush1.msra.mxu0 0.0
        %384 = vmatprep.subr.mxu0 0.0
        %385 = vmatpush1.msra.mxu0 0.0
        %386 = vmatprep.subr.mxu0 0.0
        %387 = vmatpush1.msra.mxu0 0.0
        %388 = vmatprep.subr.mxu0 0.0
        %389 = vmatpush1.msra.mxu0 0.0
        %390 = vmatprep.subr.mxu0 0.0
        %391 = vmatpush1.msra.mxu0 0.0
        %392 = vmatprep.subr.mxu0 0.0
        %393 = vmatpush1.msra.mxu0 0.0
        %394 = vmatprep.subr.mxu0 0.0
        %395 = vmatpush1.msra.mxu0 0.0
        %396 = vmatprep.subr.mxu0 0.0
        %397 = vmatpush1.msra.mxu0 0.0
        %398 = vmatprep.subr.mxu0 0.0
        %399 = vmatpush1.msra.mxu0 0.0
        %400 = vmatprep.subr.mxu0 0.0
        %401 = vmatpush1.msra.mxu0 0.0
        %402 = vmatprep.subr.mxu0 0.0
        %403 = vmatpush1.msra.mxu0 0.0
        %404 = vmatprep.subr.mxu0 0.0
        %405 = vmatpush1.msra.mxu0 0.0
        %406 = vmatprep.subr.mxu0 0.0
        %407 = vmatpush1.msra.mxu0 0.0
        %408 = vmatprep.mubr.f32.mxu0 0.0
        %409 = vmatmul.mubr.f32.gmra.mrb[0].mxu0 %v278
        %v410 = vpop.f32.mrb[0].mxu0
        %v411 = vadd.f32 %v332, %v410
        %v412 = vpop.f32.mrb[0].mxu0
        %v413 = vadd.f32 %v336, %v412
        %414 = vdwg.mxu0
        %415 = vmatprep.subr.mxu0 0.0
        %416 = vmatpush1.msra.mxu0 %v281
        %417 = vmatprep.subr.mxu0 0.0
        %418 = vmatpush1.msra.mxu0 %v284
        %419 = vmatprep.subr.mxu0 0.0
        %420 = vmatpush1.msra.mxu0 %v287
        %421 = vmatprep.subr.mxu0 0.0
        %422 = vmatpush1.msra.mxu0 %v290
        %423 = vmatprep.subr.mxu0 0.0
        %424 = vmatpush1.msra.mxu0 %v293
        %425 = vmatprep.subr.mxu0 0.0
        %426 = vmatpush1.msra.mxu0 %v296
        %427 = vmatprep.subr.mxu0 0.0
        %428 = vmatpush1.msra.mxu0 %v299
        %429 = vmatprep.subr.mxu0 0.0
        %430 = vmatpush1.msra.mxu0 %v302
        %431 = vmatprep.subr.mxu0 0.0
        %432 = vmatpush1.msra.mxu0 %v305
        %433 = vmatprep.subr.mxu0 0.0
        %434 = vmatpush1.msra.mxu0 %v308
        %435 = vmatprep.subr.mxu0 0.0
        %436 = vmatpush1.msra.mxu0 %v311
        %437 = vmatprep.subr.mxu0 0.0
        %438 = vmatpush1.msra.mxu0 %v314
        %439 = vmatprep.subr.mxu0 0.0
        %440 = vmatpush1.msra.mxu0 %v317
        %441 = vmatprep.subr.mxu0 0.0
        %442 = vmatpush1.msra.mxu0 %v320
        %443 = vmatprep.subr.mxu0 0.0
        %444 = vmatpush1.msra.mxu0 %v323
        %445 = vmatprep.subr.mxu0 0.0
        %446 = vmatpush1.msra.mxu0 %v326
        %447 = vmatprep.subr.mxu0 0.0
        %448 = vmatpush1.msra.mxu0 0.0
        %449 = vmatprep.subr.mxu0 0.0
        %450 = vmatpush1.msra.mxu0 0.0
        %451 = vmatprep.subr.mxu0 0.0
        %452 = vmatpush1.msra.mxu0 0.0
        %453 = vmatprep.subr.mxu0 0.0
        %454 = vmatpush1.msra.mxu0 0.0
        %455 = vmatprep.subr.mxu0 0.0
        %456 = vmatpush1.msra.mxu0 0.0
        %457 = vmatprep.subr.mxu0 0.0
        %458 = vmatpush1.msra.mxu0 0.0
        %459 = vmatprep.subr.mxu0 0.0
        %460 = vmatpush1.msra.mxu0 0.0
        %461 = vmatprep.subr.mxu0 0.0
        %462 = vmatpush1.msra.mxu0 0.0
        %463 = vmatprep.subr.mxu0 0.0
        %464 = vmatpush1.msra.mxu0 0.0
        %465 = vmatprep.subr.mxu0 0.0
        %466 = vmatpush1.msra.mxu0 0.0
        %467 = vmatprep.subr.mxu0 0.0
        %468 = vmatpush1.msra.mxu0 0.0
        %469 = vmatprep.subr.mxu0 0.0
        %470 = vmatpush1.msra.mxu0 0.0
        %471 = vmatprep.subr.mxu0 0.0
        %472 = vmatpush1.msra.mxu0 0.0
        %473 = vmatprep.subr.mxu0 0.0
        %474 = vmatpush1.msra.mxu0 0.0
        %475 = vmatprep.subr.mxu0 0.0
        %476 = vmatpush1.msra.mxu0 0.0
        %477 = vmatprep.subr.mxu0 0.0
        %478 = vmatpush1.msra.mxu0 0.0
        %479 = vmatprep.mubr.f32.mxu0 0.0
        %480 = vmatmul.mubr.f32.gmra.mrb[0].mxu0 %v278
        %v481 = vpop.f32.mrb[0].mxu0
        %v482 = vadd.f32 %v340, %v481
        %v483 = vpop.f32.mrb[0].mxu0
        %484 = vdwg.mxu0
        %485 = vmatprep.subr.mxu0 0.0
        %486 = vmatpush1.xpose.msra.mxu0 %v413
        %487 = vmatprep.subr.mxu0 0.0
        %488 = vmatpush1.xpose.msra.mxu0 0.0
        %489 = vmatprep.subr.mxu0 0.0
        %490 = vmatpush1.xpose.msra.mxu0 0.0
        %491 = vmatprep.subr.mxu0 0.0
        %492 = vmatpush1.xpose.msra.mxu0 0.0
        %493 = vmatprep.subr.mxu0 0.0
        %494 = vmatpush1.xpose.msra.mxu0 0.0
        %495 = vmatprep.subr.mxu0 0.0
        %496 = vmatpush1.xpose.msra.mxu0 0.0
        %497 = vmatprep.subr.mxu0 0.0
        %498 = vmatpush1.xpose.msra.mxu0 0.0
        %499 = vmatprep.subr.mxu0 0.0
        %500 = vmatpush1.xpose.msra.mxu0 0.0
        %501 = vmatprep.subr.mxu0 0.0
        %502 = vmatpush1.xpose.msra.mxu0 0.0
        %503 = vmatprep.subr.mxu0 0.0
        %504 = vmatpush1.xpose.msra.mxu0 0.0
        %505 = vmatprep.subr.mxu0 0.0
        %506 = vmatpush1.xpose.msra.mxu0 0.0
        %507 = vmatprep.subr.mxu0 0.0
        %508 = vmatpush1.xpose.msra.mxu0 0.0
        %509 = vmatprep.subr.mxu0 0.0
        %510 = vmatpush1.xpose.msra.mxu0 0.0
        %511 = vmatprep.subr.mxu0 0.0
        %512 = vmatpush1.xpose.msra.mxu0 0.0
        %513 = vmatprep.subr.mxu0 0.0
        %514 = vmatpush1.xpose.msra.mxu0 0.0
        %515 = vmatprep.subr.mxu0 0.0
        %516 = vmatpush1.xpose.msra.mxu0 0.0
        %517 = vmatprep.subr.mxu0 0.0
        %518 = vmatpush1.xpose.msra.mxu0 0.0
        %519 = vmatprep.subr.mxu0 0.0
        %520 = vmatpush1.xpose.msra.mxu0 0.0
        %521 = vmatprep.subr.mxu0 0.0
        %522 = vmatpush1.xpose.msra.mxu0 0.0
        %523 = vmatprep.subr.mxu0 0.0
        %524 = vmatpush1.xpose.msra.mxu0 0.0
        %525 = vmatprep.subr.mxu0 0.0
        %526 = vmatpush1.xpose.msra.mxu0 0.0
        %527 = vmatprep.subr.mxu0 0.0
        %528 = vmatpush1.xpose.msra.mxu0 0.0
        %529 = vmatprep.subr.mxu0 0.0
        %530 = vmatpush1.xpose.msra.mxu0 0.0
        %531 = vmatprep.subr.mxu0 0.0
        %532 = vmatpush1.xpose.msra.mxu0 0.0
        %533 = vmatprep.subr.mxu0 0.0
        %534 = vmatpush1.xpose.msra.mxu0 0.0
        %535 = vmatprep.subr.mxu0 0.0
        %536 = vmatpush1.xpose.msra.mxu0 0.0
        %537 = vmatprep.subr.mxu0 0.0
        %538 = vmatpush1.xpose.msra.mxu0 0.0
        %539 = vmatprep.subr.mxu0 0.0
        %540 = vmatpush1.xpose.msra.mxu0 0.0
        %541 = vmatprep.subr.mxu0 0.0
        %542 = vmatpush1.xpose.msra.mxu0 0.0
        %543 = vmatprep.subr.mxu0 0.0
        %544 = vmatpush1.xpose.msra.mxu0 0.0
        %545 = vmatprep.subr.mxu0 0.0
        %546 = vmatpush1.xpose.msra.mxu0 0.0
        %547 = vmatprep.subr.mxu0 0.0
        %548 = vmatpush1.xpose.msra.mxu0 0.0
        %549 = vmatprep.mubr.f32.mxu0 0.0
        %550 = vmatmul.mubr.f32.gmra.mrb[0].mxu0 %v411
        %v551 = vpop.f32.mrb[0].mxu0
        %v552 = vadd.f32 0.0, %v551
        %v553 = vpop.f32.mrb[0].mxu0
        %554 = vdwg.mxu0
        %vm555 = vcmask 64512
        %v556 = vsel %vm555, %v552, -inf
        %557 = vmax.xlane.f32.xlu0 %v556
        %v558 = vpop.xlane.xlu0 %557
        %v559 = vsub.f32 %v552, %v558
        %v560 = vmul.f32 %v559, 1.442695
        %v561 = vpow.pop %v560
        %v562 = vsel %vm555, %v561, 0.0
        %563 = vadd.xlane.f32.xlu0 %v562
        %v564 = vpop.xlane.xlu0 %563
        %v565 = vrcp.pop %v564
        %v566 = vmul.f32 %v561, %v565
        %v568 = vsel %vm555, %v566, 0
        %570 = vmatprep.subr.mxu0 0.0
        %571 = vmatpush1.msra.mxu0 %v482
        %572 = vmatprep.subr.mxu0 0.0
        %573 = vmatpush1.msra.mxu0 0.0
        %574 = vmatprep.subr.mxu0 0.0
        %575 = vmatpush1.msra.mxu0 0.0
        %576 = vmatprep.subr.mxu0 0.0
        %577 = vmatpush1.msra.mxu0 0.0
        %578 = vmatprep.subr.mxu0 0.0
        %579 = vmatpush1.msra.mxu0 0.0
        %580 = vmatprep.subr.mxu0 0.0
        %581 = vmatpush1.msra.mxu0 0.0
        %582 = vmatprep.subr.mxu0 0.0
        %583 = vmatpush1.msra.mxu0 0.0
        %584 = vmatprep.subr.mxu0 0.0
        %585 = vmatpush1.msra.mxu0 0.0
        %586 = vmatprep.subr.mxu0 0.0
        %587 = vmatpush1.msra.mxu0 0.0
        %588 = vmatprep.subr.mxu0 0.0
        %589 = vmatpush1.msra.mxu0 0.0
        %590 = vmatprep.subr.mxu0 0.0
        %591 = vmatpush1.msra.mxu0 0.0
        %592 = vmatprep.subr.mxu0 0.0
        %593 = vmatpush1.msra.mxu0 0.0
        %594 = vmatprep.subr.mxu0 0.0
        %595 = vmatpush1.msra.mxu0 0.0
        %596 = vmatprep.subr.mxu0 0.0
        %597 = vmatpush1.msra.mxu0 0.0
        %598 = vmatprep.subr.mxu0 0.0
        %599 = vmatpush1.msra.mxu0 0.0
        %600 = vmatprep.subr.mxu0 0.0
        %601 = vmatpush1.msra.mxu0 0.0
        %602 = vmatprep.subr.mxu0 0.0
        %603 = vmatpush1.msra.mxu0 0.0
        %604 = vmatprep.subr.mxu0 0.0
        %605 = vmatpush1.msra.mxu0 0.0
        %606 = vmatprep.subr.mxu0 0.0
        %607 = vmatpush1.msra.mxu0 0.0
        %608 = vmatprep.subr.mxu0 0.0
        %609 = vmatpush1.msra.mxu0 0.0
        %610 = vmatprep.subr.mxu0 0.0
        %611 = vmatpush1.msra.mxu0 0.0
        %612 = vmatprep.subr.mxu0 0.0
        %613 = vmatpush1.msra.mxu0 0.0
        %614 = vmatprep.subr.mxu0 0.0
        %615 = vmatpush1.msra.mxu0 0.0
        %616 = vmatprep.subr.mxu0 0.0
        %617 = vmatpush1.msra.mxu0 0.0
        %618 = vmatprep.subr.mxu0 0.0
        %619 = vmatpush1.msra.mxu0 0.0
        %620 = vmatprep.subr.mxu0 0.0
        %621 = vmatpush1.msra.mxu0 0.0
        %622 = vmatprep.subr.mxu0 0.0
        %623 = vmatpush1.msra.mxu0 0.0
        %624 = vmatprep.subr.mxu0 0.0
        %625 = vmatpush1.msra.mxu0 0.0
        %626 = vmatprep.subr.mxu0 0.0
        %627 = vmatpush1.msra.mxu0 0.0
        %628 = vmatprep.subr.mxu0 0.0
        %629 = vmatpush1.msra.mxu0 0.0
        %630 = vmatprep.subr.mxu0 0.0
        %631 = vmatpush1.msra.mxu0 0.0
        %632 = vmatprep.subr.mxu0 0.0
        %633 = vmatpush1.msra.mxu0 0.0
        %634 = vmatprep.mubr.f32.mxu0 0.0
        %635 = vmatmul.mubr.f32.gmra.mrb[0].mxu0 %v568
        %v636 = vpop.f32.mrb[0].mxu0
        %v637 = vadd.f32 0.0, %v636
        %v638 = vpop.f32.mrb[0].mxu0
        %639 = vdwg.mxu0
        %v640 = vld [vmem:[#allocation7] sm:$0xff]
        %v641 = vld [vmem:[#allocation7 + $0x8] sm:$0xff]
        %v642 = vld [vmem:[#allocation7 + $0x10] sm:$0xff]
        %v643 = vld [vmem:[#allocation7 + $0x18] sm:$0xff]
        %v644 = vld [vmem:[#allocation7 + $0x20] sm:$0xff]
        %v645 = vld [vmem:[#allocation7 + $0x28] sm:$0xff]
        %v646 = vld [vmem:[#allocation7 + $0x30] sm:$0xff]
        %v647 = vld [vmem:[#allocation7 + $0x38] sm:$0xff]
        %v648 = vld [vmem:[#allocation7 + $0x40] sm:$0xff]
        %v649 = vld [vmem:[#allocation7 + $0x48] sm:$0xff]
        %v650 = vld [vmem:[#allocation7 + $0x50] sm:$0xff]
        %v651 = vld [vmem:[#allocation7 + $0x58] sm:$0xff]
        %v652 = vld [vmem:[#allocation7 + $0x60] sm:$0xff]
        %v653 = vld [vmem:[#allocation7 + $0x68] sm:$0xff]
        %v654 = vld [vmem:[#allocation7 + $0x70] sm:$0xff]
        %v655 = vld [vmem:[#allocation7 + $0x78] sm:$0xff]
        %v656 = vld [vmem:[%s4] sm:$0x1]
        %v658 = vlaneseq
        %v659 = vshrl.u32 %v658, 7
        %v660 = vsub.s32 0, %v659
        %v661 = vrot.slane %v656, %v660
        %663 = vmatprep.subr.mxu0 0.0
        %664 = vmatpush1.msra.mxu0 %v640
        %665 = vmatprep.subr.mxu0 0.0
        %666 = vmatpush1.msra.mxu0 %v641
        %667 = vmatprep.subr.mxu0 0.0
        %668 = vmatpush1.msra.mxu0 %v642
        %669 = vmatprep.subr.mxu0 0.0
        %670 = vmatpush1.msra.mxu0 %v643
        %671 = vmatprep.subr.mxu0 0.0
        %672 = vmatpush1.msra.mxu0 %v644
        %673 = vmatprep.subr.mxu0 0.0
        %674 = vmatpush1.msra.mxu0 %v645
        %675 = vmatprep.subr.mxu0 0.0
        %676 = vmatpush1.msra.mxu0 %v646
        %677 = vmatprep.subr.mxu0 0.0
        %678 = vmatpush1.msra.mxu0 %v647
        %679 = vmatprep.subr.mxu0 0.0
        %680 = vmatpush1.msra.mxu0 %v648
        %681 = vmatprep.subr.mxu0 0.0
        %682 = vmatpush1.msra.mxu0 %v649
        %683 = vmatprep.subr.mxu0 0.0
        %684 = vmatpush1.msra.mxu0 %v650
        %685 = vmatprep.subr.mxu0 0.0
        %686 = vmatpush1.msra.mxu0 %v651
        %687 = vmatprep.subr.mxu0 0.0
        %688 = vmatpush1.msra.mxu0 %v652
        %689 = vmatprep.subr.mxu0 0.0
        %690 = vmatpush1.msra.mxu0 %v653
        %691 = vmatprep.subr.mxu0 0.0
        %692 = vmatpush1.msra.mxu0 %v654
        %693 = vmatprep.subr.mxu0 0.0
        %694 = vmatpush1.msra.mxu0 %v655
        %695 = vmatprep.subr.mxu0 0.0
        %696 = vmatpush1.msra.mxu0 0.0
        %697 = vmatprep.subr.mxu0 0.0
        %698 = vmatpush1.msra.mxu0 0.0
        %699 = vmatprep.subr.mxu0 0.0
        %700 = vmatpush1.msra.mxu0 0.0
        %701 = vmatprep.subr.mxu0 0.0
        %702 = vmatpush1.msra.mxu0 0.0
        %703 = vmatprep.subr.mxu0 0.0
        %704 = vmatpush1.msra.mxu0 0.0
        %705 = vmatprep.subr.mxu0 0.0
        %706 = vmatpush1.msra.mxu0 0.0
        %707 = vmatprep.subr.mxu0 0.0
        %708 = vmatpush1.msra.mxu0 0.0
        %709 = vmatprep.subr.mxu0 0.0
        %710 = vmatpush1.msra.mxu0 0.0
        %711 = vmatprep.subr.mxu0 0.0
        %712 = vmatpush1.msra.mxu0 0.0
        %713 = vmatprep.subr.mxu0 0.0
        %714 = vmatpush1.msra.mxu0 0.0
        %715 = vmatprep.subr.mxu0 0.0
        %716 = vmatpush1.msra.mxu0 0.0
        %717 = vmatprep.subr.mxu0 0.0
        %718 = vmatpush1.msra.mxu0 0.0
        %719 = vmatprep.subr.mxu0 0.0
        %720 = vmatpush1.msra.mxu0 0.0
        %721 = vmatprep.subr.mxu0 0.0
        %722 = vmatpush1.msra.mxu0 0.0
        %723 = vmatprep.subr.mxu0 0.0
        %724 = vmatpush1.msra.mxu0 0.0
        %725 = vmatprep.subr.mxu0 0.0
        %726 = vmatpush1.msra.mxu0 0.0
        %727 = vmatprep.mubr.f32.mxu0 0.0
        %728 = vmatmul.mubr.f32.gmra.mrb[0].mxu0 %v637
        %v729 = vpop.f32.mrb[0].mxu0
        %v730 = vadd.f32 %v661, %v729
        %v731 = vpop.f32.mrb[0].mxu0
        %732 = vdwg.mxu0
        %733 = vst [vmem:[%s268] sm:$0xff] %v730
        %s734 = sand.u32 %s141, 1
        %s735 = scalar_lea.sflag [#allocation4], %s734
        %s736 = sand.u32 %s141, 1
        %s737 = smul.addr %s736, 8
        %s738 = scalar_lea.vmem [#allocation8], %s737
        // Predicated region
        $region53: #{tpu_custom_call.1} parent=39 // pred_check
          %p739 = pneg %p151
        $region54: #{tpu_custom_call.1} parent=39 // pred_check_branch
          %741 = sbr.rel (%p739) target = $region56
        $region55: #{tpu_custom_call.1} parent=39 // pred_region
          %s743 = ssub.s32 128, 128
          %744 = vsyncadd %s735, %s743
          %s745 = smul.addr %s23, 128
          %s746 = scalar_lea.hbm %s5, %s745
          %s748 = sshll.u32 %s738, 4
          %s749 = int_to_ptr.vmem [resolvable:$true] %s748
          %751 = dma.vmem_to_hbm [thread:$0]  %s749, 128, %s746, %s735
        $region56: #{tpu_custom_call.1} parent=39 // pred_fallthru
          _
      $region40: #{tpu_custom_call.1} parent=5 // pred_fallthru
        _
      %p752 = scmp.le.s32.totalorder 2, %s18
      // Predicated region
      $region57: #{tpu_custom_call.1} parent=5 // pred_check
        %p753 = pneg %p752
      $region58: #{tpu_custom_call.1} parent=5 // pred_check_branch
        %755 = sbr.rel (%p753) target = $region60
      $region59: #{tpu_custom_call.1} parent=5 // pred_region
        %s756 = ssub.s32 %s18, 2
        // Predicated region
        $region61: #{tpu_custom_call.1} parent=59 // pred_check
          %p757 = pneg %p157
        $region62: #{tpu_custom_call.1} parent=59 // pred_check_branch
          %759 = sbr.rel (%p757) target = $region64
        $region63: #{tpu_custom_call.1} parent=59 // pred_region
          %s760 = sand.u32 %s142, 1
          %s761 = scalar_lea.sflag [#allocation4], %s760
          %s762 = sand.u32 %s142, 1
          %s763 = smul.addr %s762, 8
          %s764 = scalar_lea.vmem [#allocation8], %s763
          %765 = dma.done %s761, 128
        $region64: #{tpu_custom_call.1} parent=59 // pred_fallthru
          _
      $region60: #{tpu_custom_call.1} parent=5 // pred_fallthru
        _
    $region6: #{tpu_custom_call.1} parent=1 // loop_footer
      %s22 = sadd.s32 1, %s18
    $region7: #{tpu_custom_call.1} parent=1 // loop_footer_branch
      %17 = sbr.rel target = $region3
    $region8: #{tpu_custom_call.1} parent=1 // loop_exit
      _
    %766 = vsyncpa [#allocation3], 1
    %s767 = scalar_lea.sflag [#allocation3], 1
    %768 = vsyncpa %s767, 1
    %769 = vsyncpa [#allocation6], 1
    %770 = vsyncpa [#allocation4], 1
    %s771 = scalar_lea.sflag [#allocation4], 1
    %772 = vsyncpa %s771, 1

</llo_original>
